<compile_context>
chip_gen: v7x
topology: tpu7x:2x2x1
jax: 0.10.0
libtpu: 0.0.40
codegen_flags: <defaults>
</compile_context>

<pallas_src>
import functools

import numpy as np
import jax
import jax.numpy as jnp
from jax import lax
from jax.experimental import pallas as pl
from jax.experimental.pallas import tpu as pltpu

ALPHA = 0.25
# GAMMA == 2.0 exactly -> implemented as x * x


def _round_up(x, m):
    return (x + m - 1) // m * m


def paps_loss_kernel(cls_ref, reg_ref, anc_ref, ann_ref, out_ref, acc_ref, *,
                     iou_threshold, beta, a_total, tiles_per_split,
                     use_mxu_gather):
    s = pl.program_id(0)
    t = pl.program_id(2)
    n_t = pl.num_programs(2)
    TA = anc_ref.shape[1]
    C = cls_ref.shape[2]
    M = ann_ref.shape[1]

    @pl.when(t == 0)
    def _init():
        acc_ref[...] = jnp.zeros_like(acc_ref)

    # Lane mask for the ragged tail of the anchor axis (inputs are NOT padded).
    tile_idx = s * tiles_per_split + t
    lane_ids = lax.broadcasted_iota(jnp.int32, (1, TA), 1) + tile_idx * TA
    a_valid = lane_ids < a_total                                    # (1, TA)

    # Native (ta, C)/(ta, 4) blocks -> lane-dense (C, ta)/(4, ta) via the XLU.
    classification = jnp.clip(jnp.transpose(cls_ref[0]), 1e-4, 1.0 - 1e-4)
    regression = jnp.transpose(reg_ref[0])                          # (4, TA)
    anc = anc_ref[...]                                              # (8, TA)
    ann = ann_ref[0]                                                # (M, 5)

    ax1, ay1 = anc[0:1, :], anc[1:2, :]
    ax2, ay2 = anc[2:3, :], anc[3:4, :]
    aw, ah = anc[4:5, :], anc[5:6, :]
    acx, acy = anc[6:7, :], anc[7:8, :]

    bx1, by1 = ann[:, 0:1], ann[:, 1:2]                             # (M, 1)
    bx2, by2 = ann[:, 2:3], ann[:, 3:4]
    blab = ann[:, 4:5]
    valid = blab != -1.0                                            # (M, 1)

    # ---- IoU (M, TA): gt boxes on sublanes, anchors on lanes ---------------
    area_b = (bx2 - bx1) * (by2 - by1)                              # (M, 1)
    iw = jnp.maximum(jnp.minimum(ax2, bx2) - jnp.maximum(ax1, bx1), 0.0)
    ih = jnp.maximum(jnp.minimum(ay2, by2) - jnp.maximum(ay1, by1), 0.0)
    inter = iw * ih                                                 # (M, TA)
    ua = jnp.maximum(aw * ah + area_b - inter, 1e-8)
    iou = inter / ua                                                # (M, TA)

    # max over valid gt boxes (IoU >= 0, so -1 is a safe "invalid" fill)
    iou_max = jnp.max(jnp.where(valid, iou, -1.0), axis=0, keepdims=True)

    # first argmax over valid annotations -> one-hot (torch/np tie-break)
    row_ids = lax.broadcasted_iota(jnp.int32, (M, TA), 0)
    is_max = (iou == iou_max) & valid
    min_idx = jnp.min(jnp.where(is_max, row_ids, jnp.int32(M + 1)),
                      axis=0, keepdims=True)                        # (1, TA)
    onehot = (row_ids == min_idx).astype(jnp.float32)               # (M, TA)

    # ---- assigned annotation per anchor ------------------------------------
    if use_mxu_gather:
        # MXU gather for larger annotation counts (MXU is otherwise idle).
        g = lax.dot_general(jnp.transpose(ann), onehot,
                            (((1,), (0,)), ((), ())),
                            precision=lax.Precision.HIGHEST,
                            preferred_element_type=jnp.float32)     # (5, TA)
        gx1, gy1, gx2, gy2, glab = g[0:1], g[1:2], g[2:3], g[3:4], g[4:5]
    else:
        def gather(col):                                            # (M, 1)
            return jnp.sum(onehot * col, axis=0, keepdims=True)     # (1, TA)
        gx1, gy1, gx2, gy2 = gather(bx1), gather(by1), gather(bx2), gather(by2)
        glab = gather(blab)

    positive = (iou_max >= (iou_threshold + 0.1)) & a_valid         # (1, TA)
    bg_active = ((iou_max < iou_threshold) | positive) & a_valid    # (1, TA)

    # ---- focal classification loss (filter_option == 4 path) ---------------
    # Background term over (C, TA) with ONE log pass; per-anchor foreground
    # correction on positive anchors only.  Selects (not multiplies) are used
    # so garbage in the ragged tail of the input block can never leak.
    neg_log_1mc = -jnp.log(1.0 - classification)                    # (C, TA) EUP
    bg_raw = classification * classification * neg_log_1mc          # (C, TA)
    bg_sum = (1.0 - ALPHA) * jnp.sum(bg_raw, axis=0, keepdims=True)  # (1, TA)

    cls_rows = lax.broadcasted_iota(jnp.int32, (C, TA), 0)
    lab_i = glab.astype(jnp.int32)                                  # (1, TA)
    cls_onehot = (cls_rows == lab_i).astype(jnp.float32)            # (C, TA)
    c_lab = jnp.sum(cls_onehot * classification, axis=0, keepdims=True)
    bg_lab = (1.0 - ALPHA) * jnp.sum(cls_onehot * bg_raw, axis=0, keepdims=True)
    fg_lab = ALPHA * (1.0 - c_lab) * (1.0 - c_lab) * (-jnp.log(c_lab))

    cls_vec = (jnp.where(bg_active, bg_sum, 0.0)
               + jnp.where(positive, fg_lab - bg_lab, 0.0))          # (1, TA)

    # ---- smooth-L1 regression loss on positive anchors ----------------------
    gw = gx2 - gx1
    gh = gy2 - gy1
    gcx = gx1 + 0.5 * gw
    gcy = gy1 + 0.5 * gh
    gw = jnp.maximum(gw, 1.0)
    gh = jnp.maximum(gh, 1.0)
    tdx = (gcx - acx) / aw
    tdy = (gcy - acy) / ah
    tdw = jnp.log(gw / aw)
    tdh = jnp.log(gh / ah)

    def smooth_l1(d):
        return jnp.where(d <= beta, 0.5 * d * d / beta, d - 0.5 * beta)

    d0 = jnp.abs(tdx - regression[0:1, :])
    d1 = jnp.abs(tdy - regression[1:2, :])
    d2 = jnp.abs(tdw - regression[2:3, :])
    d3 = jnp.abs(tdh - regression[3:4, :])
    reg_vec = jnp.where(positive,
                        smooth_l1(d0) + smooth_l1(d1)
                        + smooth_l1(d2) + smooth_l1(d3),
                        0.0)                                         # (1, TA)

    # ---- accumulate lane-vector partials (cross-lane reduce deferred) -------
    acc_ref[0:1, :] += cls_vec
    acc_ref[1:2, :] += reg_vec
    acc_ref[2:3, :] += positive.astype(jnp.float32)

    # ---- finalize on the last anchor tile of this (split, batch) ------------
    @pl.when(t == n_t - 1)
    def _finalize():
        totals = jnp.sum(acc_ref[...], axis=1, keepdims=True)       # (8, 1)
        out_ref[...] = jnp.broadcast_to(totals, (8, 128))[None, None]


def paps_loss(classifications, regressions, anchors, annotations,
              iou_threshold=0.5, beta=1.0, tile_a=None):
    """Pallas implementation of PapsLoss.forward (filter_option=4, pimages=None)."""
    B, A, C = classifications.shape
    M = annotations.shape[1]
    f32 = jnp.float32

    # ---- VMEM-aware anchor-tile size + matching vmem limit ------------------
    try:
        vmem_cap = int(pltpu.get_tpu_info().vmem_capacity_bytes)
    except Exception:
        vmem_cap = 64 * 1024 * 1024
    vmem_limit = int(min(vmem_cap // 2, 96 * 1024 * 1024))
    budget = vmem_limit // 2
    # f32 bytes per anchor lane: ~8 live (C, ta) temps, ~8 live (M, ta) temps,
    # double-buffered (ta, C)/(ta, 4) input blocks, anchor table + accumulator.
    bytes_per_lane = 4 * (8 * C + 8 * max(M, 1) + 2 * (C + 4) + 24)
    ta = max(128, (budget // bytes_per_lane) // 128 * 128)
    if tile_a is not None:
        ta = max(128, min(ta, int(tile_a) // 128 * 128))
    ta = min(ta, _round_up(A, 128))
    n_tiles = -(-A // ta)

    # Reduction-axis split: keeps both v7x TensorCores busy even for B == 1;
    # near-free elsewhere.  Only used when the tile count splits evenly.
    n_split = 2 if (n_tiles % 2 == 0 and n_tiles >= 2) else 1
    tps = n_tiles // n_split
    a_pad = n_tiles * ta

    # Precomputed anchor table (batch-invariant math hoisted out of the kernel),
    # padded with non-degenerate boxes so tail lanes never divide by zero.
    anchor0 = anchors[0].astype(f32)                                 # (A, 4)
    if a_pad != A:
        pad_box = jnp.tile(jnp.asarray([[0.0, 0.0, 1.0, 1.0]], f32),
                           (a_pad - A, 1))
        anchor0 = jnp.concatenate([anchor0, pad_box], axis=0)
    aw = anchor0[:, 2] - anchor0[:, 0]
    ah = anchor0[:, 3] - anchor0[:, 1]
    acx = anchor0[:, 0] + 0.5 * aw
    acy = anchor0[:, 1] + 0.5 * ah
    anc_table = jnp.stack([anchor0[:, 0], anchor0[:, 1], anchor0[:, 2],
                           anchor0[:, 3], aw, ah, acx, acy], axis=0)  # (8, a_pad)

    cls_in = classifications.astype(f32)        # native (B, A, C): no copy/pad
    reg_in = regressions.astype(f32)            # native (B, A, 4)
    ann = annotations.astype(f32)               # (B, M, 5)

    kernel = functools.partial(paps_loss_kernel,
                               iou_threshold=float(iou_threshold),
                               beta=float(beta), a_total=A,
                               tiles_per_split=tps,
                               use_mxu_gather=(M >= 32))

    out = pl.pallas_call(
        kernel,
        out_shape=jax.ShapeDtypeStruct((n_split, B, 8, 128), jnp.float32),
        grid_spec=pltpu.PrefetchScalarGridSpec(
            num_scalar_prefetch=0,
            grid=(n_split, B, tps),
            in_specs=[
                # NOTE: if profiling shows this DMA exposed at large ta on v6e,
                # add pipeline_mode=pl.Buffered(3) to this BlockSpec.
                pl.BlockSpec((1, ta, C), lambda s, b, t: (b, s * tps + t, 0)),
                pl.BlockSpec((1, ta, 4), lambda s, b, t: (b, s * tps + t, 0)),
                pl.BlockSpec((8, ta), lambda s, b, t: (0, s * tps + t)),
                pl.BlockSpec((1, M, 5), lambda s, b, t: (b, 0, 0)),
            ],
            out_specs=pl.BlockSpec((1, 1, 8, 128),
                                   lambda s, b, t: (s, b, 0, 0)),
            scratch_shapes=[pltpu.VMEM((8, ta), jnp.float32)],
        ),
        compiler_params=pltpu.CompilerParams(
            dimension_semantics=("parallel", "parallel", "arbitrary"),
            vmem_limit_bytes=vmem_limit),
    )(cls_in, reg_in, anc_table, ann)

    # Combine per-(split, batch) raw sums and normalise (B scalars, trivial).
    totals = jnp.sum(out[:, :, :, 0], axis=0)                        # (B, 8)
    cls_sum, reg_sum, npos = totals[:, 0], totals[:, 1], totals[:, 2]
    cls_losses = cls_sum / jnp.maximum(npos, 1.0)
    reg_losses = jnp.where(npos > 0.0,
                           reg_sum / jnp.maximum(4.0 * npos, 1.0), 0.0)
    num_detected = jnp.sum(npos).astype(jnp.int32)
    # matches PapsLoss return structure (avg_background / avg_foreground are
    # always empty lists in the reference implementation)
    return (jnp.mean(cls_losses, keepdims=True),
            jnp.mean(reg_losses, keepdims=True),
            num_detected, [], [])


# ---------------- pure-numpy reference (mirrors the torch code) -------------
def paps_loss_ref(classifications, regressions, anchors, annotations,
                  iou_threshold=0.5, beta=1.0):
    B = classifications.shape[0]
    anchor = anchors[0]
    aw = anchor[:, 2] - anchor[:, 0]
    ah = anchor[:, 3] - anchor[:, 1]
    acx = anchor[:, 0] + 0.5 * aw
    acy = anchor[:, 1] + 0.5 * ah
    cls_losses, reg_losses = [], []
    num_det = 0
    for j in range(B):
        cls_ = np.clip(classifications[j], 1e-4, 1 - 1e-4)
        reg_ = regressions[j]
        ann = annotations[j]
        ann = ann[ann[:, 4] != -1]
        if ann.shape[0] == 0:
            cls_losses.append(np.sum(0.75 * cls_ ** 2 * (-np.log(1 - cls_))))
            reg_losses.append(0.0)
            continue
        area = (ann[:, 2] - ann[:, 0]) * (ann[:, 3] - ann[:, 1])
        iw = np.clip(np.minimum(anchor[:, 2:3], ann[None, :, 2])
                     - np.maximum(anchor[:, 0:1], ann[None, :, 0]), 0, None)
        ih = np.clip(np.minimum(anchor[:, 3:4], ann[None, :, 3])
                     - np.maximum(anchor[:, 1:2], ann[None, :, 1]), 0, None)
        ua = np.clip(((anchor[:, 2] - anchor[:, 0]) * (anchor[:, 3] - anchor[:, 1]))[:, None]
                     + area[None, :] - iw * ih, 1e-8, None)
        iou = iw * ih / ua
        iou_max = iou.max(axis=1)
        iou_argmax = iou.argmax(axis=1)
        targets = np.full(cls_.shape, -1.0, dtype=np.float32)
        targets[iou_max < iou_threshold, :] = 0
        positive = iou_max >= iou_threshold + 0.1
        npos = int(positive.sum())
        num_det += npos
        assigned = ann[iou_argmax]
        targets[positive, :] = 0
        targets[positive, assigned[positive, 4].astype(int)] = 1
        af = np.where(targets == 1.0, 0.25, 0.75)
        fw = np.where(targets == 1.0, 1.0 - cls_, cls_)
        fw = af * fw ** 2
        bce = -(targets * np.log(cls_) + (1.0 - targets) * np.log(1.0 - cls_))
        cl = fw * bce
        cl = np.where(targets >= -0.1, cl, 0.0)
        cls_losses.append(cl.sum() / max(npos, 1))
        if npos > 0:
            asg = assigned[positive]
            awp, ahp = aw[positive], ah[positive]
            acxp, acyp = acx[positive], acy[positive]
            gw = asg[:, 2] - asg[:, 0]
            gh = asg[:, 3] - asg[:, 1]
            gcx = asg[:, 0] + 0.5 * gw
            gcy = asg[:, 1] + 0.5 * gh
            gw = np.clip(gw, 1, None)
            gh = np.clip(gh, 1, None)
            t = np.stack([(gcx - acxp) / awp, (gcy - acyp) / ahp,
                          np.log(gw / awp), np.log(gh / ahp)], axis=1)
            d = np.abs(t - reg_[positive])
            rl = np.where(d <= beta, 0.5 * d * d / beta, d - 0.5 * beta)
            reg_losses.append(rl.mean())
        else:
            reg_losses.append(0.0)
    return np.mean(cls_losses), np.mean(reg_losses), num_det


if __name__ == "__main__":
    B, A, C, M = 2, 128, 4, 8
    key = jax.random.PRNGKey(0)
    k1, k2, k3 = jax.random.split(key, 3)

    # anchors on a 16x8 grid of 10x12 boxes
    idx = jnp.arange(A, dtype=jnp.float32)
    cx = (idx % 16) * 8.0 + 4.0
    cy = jnp.floor(idx / 16) * 8.0 + 4.0
    w = jnp.full((A,), 10.0)
    h = jnp.full((A,), 12.0)
    anchor = jnp.stack([cx - 0.5 * w, cy - 0.5 * h,
                        cx + 0.5 * w, cy + 0.5 * h], axis=1)
    anchors = anchor[None, :, :]                               # (1, A, 4)

    classifications = jax.nn.sigmoid(
        jax.random.normal(k1, (B, A, C), jnp.float32))          # (B, A, C)
    regressions = 0.1 * jax.random.normal(k2, (B, A, 4), jnp.float32)

    # annotations: jittered copies of a few anchors (so positives exist) + padding
    annotations = np.full((B, M, 5), -1.0, dtype=np.float32)
    jit = np.asarray(jax.random.uniform(k3, (B, M, 4), minval=-1.0, maxval=1.0))
    anchor_np = np.asarray(anchor)
    for i, s in enumerate([3, 17, 42, 77]):
        annotations[0, i, :4] = anchor_np[s] + jit[0, i]
        annotations[0, i, 4] = float(i % C)
    for i, s in enumerate([10, 55, 90]):
        annotations[1, i, :4] = anchor_np[s] + jit[1, i]
        annotations[1, i, 4] = float((i + 1) % C)
    annotations = jnp.asarray(annotations)

    cls_loss, reg_loss, num_det, avg_bg, avg_fg = paps_loss(
        classifications, regressions, anchors, annotations)
    jax.block_until_ready((cls_loss, reg_loss, num_det))

    rc, rr, rn = paps_loss_ref(np.asarray(classifications),
                               np.asarray(regressions),
                               np.asarray(anchors),
                               np.asarray(annotations))
    assert np.allclose(np.asarray(cls_loss)[0], rc, rtol=1e-3, atol=1e-4), \
        (float(cls_loss[0]), rc)
    assert np.allclose(np.asarray(reg_loss)[0], rr, rtol=1e-3, atol=1e-4), \
        (float(reg_loss[0]), rr)
    assert int(num_det) == int(rn), (int(num_det), rn)
    print("KERNEL_OK")
</pallas_src>

<mosaic_0001>
module attributes {stable_mosaic.version = 11 : i64} {
  func.func @paps_loss_kernel(%arg0: i32, %arg1: i32, %arg2: i32, %arg3: memref<1x128x4xf32, #tpu.memory_space<vmem>>, %arg4: memref<1x128x4xf32, #tpu.memory_space<vmem>>, %arg5: memref<8x128xf32, #tpu.memory_space<vmem>>, %arg6: memref<1x8x5xf32, #tpu.memory_space<vmem>>, %arg7: memref<1x1x8x128xf32, #tpu.memory_space<vmem>>, %arg8: memref<8x128xf32, #tpu.memory_space<vmem>>) attributes {dimension_semantics = [#tpu.dimension_semantics<parallel>, #tpu.dimension_semantics<parallel>, #tpu.dimension_semantics<arbitrary>], iteration_bounds = array<i64: 1, 2, 1>, scalar_prefetch = 0 : i64, scratch_operands = 1 : i64, tpu.core_type = #tpu.core_type<tc>, window_params = [{transform_indices = @transform_0, window_bounds = array<i64: 1, 128, 4>}, {transform_indices = @transform_1, window_bounds = array<i64: 1, 128, 4>}, {transform_indices = @transform_2, window_bounds = array<i64: 8, 128>}, {transform_indices = @transform_3, window_bounds = array<i64: 1, 8, 5>}, {transform_indices = @transform_4, window_bounds = array<i64: 1, 1, 8, 128>}]} {
    %c0_i32 = arith.constant 0 : i32
    %0 = arith.cmpi eq, %arg2, %c0_i32 : i32
    %1 = arith.extui %0 : i1 to i32
    %c0_i32_0 = arith.constant 0 : i32
    %2 = arith.cmpi ne, %1, %c0_i32_0 : i32
    scf.if %2 {
      %cst_73 = arith.constant 0.000000e+00 : f32
      %248 = vector.broadcast %cst_73 : f32 to vector<8x128xf32>
      %c0_74 = arith.constant 0 : index
      %c0_75 = arith.constant 0 : index
      %249 = vector.load %arg8[%c0_74, %c0_75] : memref<8x128xf32, #tpu.memory_space<vmem>>, vector<8x128xf32>
      tpu.vector_store %arg8[%c0_74, %c0_75], %248 {strides = array<i32>} : memref<8x128xf32, #tpu.memory_space<vmem>>, vector<8x128xf32>,
    } else {
    }
    %c1_i32 = arith.constant 1 : i32
    %3 = arith.muli %arg0, %c1_i32 : i32
    %4 = arith.addi %3, %arg2 : i32
    %5 = tpu.iota {dimensions = array<i32: 1>} : vector<1x128xi32>
    %c128_i32 = arith.constant 128 : i32
    %6 = arith.muli %4, %c128_i32 : i32
    %7 = vector.broadcast %6 : i32 to vector<1x128xi32>
    %8 = arith.addi %5, %7 : vector<1x128xi32>
    %c128_i32_1 = arith.constant 128 : i32
    %9 = vector.broadcast %c128_i32_1 : i32 to vector<1x128xi32>
    %10 = arith.cmpi slt, %8, %9 : vector<1x128xi32>
    %c0 = arith.constant 0 : index
    %c0_2 = arith.constant 0 : index
    %c0_3 = arith.constant 0 : index
    %11 = vector.load %arg3[%c0, %c0_2, %c0_3] : memref<1x128x4xf32, #tpu.memory_space<vmem>>, vector<1x128x4xf32>
    %12 = vector.shape_cast %11 : vector<1x128x4xf32> to vector<128x4xf32>
    %13 = tpu.transpose %12, [1, 0] : vector<128x4xf32> -> vector<4x128xf32>
    %cst = arith.constant 9.99999974E-5 : f32
    %cst_4 = arith.constant 0.999899983 : f32
    %14 = vector.broadcast %cst : f32 to vector<4x128xf32>
    %15 = arith.maximumf %14, %13 : vector<4x128xf32>
    %16 = vector.broadcast %cst_4 : f32 to vector<4x128xf32>
    %17 = arith.minimumf %16, %15 : vector<4x128xf32>
    %c0_5 = arith.constant 0 : index
    %c0_6 = arith.constant 0 : index
    %c0_7 = arith.constant 0 : index
    %18 = vector.load %arg4[%c0_5, %c0_6, %c0_7] : memref<1x128x4xf32, #tpu.memory_space<vmem>>, vector<1x128x4xf32>
    %19 = vector.shape_cast %18 : vector<1x128x4xf32> to vector<128x4xf32>
    %20 = tpu.transpose %19, [1, 0] : vector<128x4xf32> -> vector<4x128xf32>
    %c0_8 = arith.constant 0 : index
    %c0_9 = arith.constant 0 : index
    %21 = vector.load %arg5[%c0_8, %c0_9] : memref<8x128xf32, #tpu.memory_space<vmem>>, vector<8x128xf32>
    %c0_10 = arith.constant 0 : index
    %c0_11 = arith.constant 0 : index
    %c0_12 = arith.constant 0 : index
    %22 = vector.load %arg6[%c0_10, %c0_11, %c0_12] : memref<1x8x5xf32, #tpu.memory_space<vmem>>, vector<1x8x5xf32>
    %23 = vector.shape_cast %22 : vector<1x8x5xf32> to vector<8x5xf32>
    %24 = vector.extract_strided_slice %21 {offsets = [0, 0], sizes = [1, 128], strides = [1, 1]} : vector<8x128xf32> to vector<1x128xf32>
    %25 = vector.extract_strided_slice %21 {offsets = [1, 0], sizes = [1, 128], strides = [1, 1]} : vector<8x128xf32> to vector<1x128xf32>
    %26 = vector.extract_strided_slice %21 {offsets = [2, 0], sizes = [1, 128], strides = [1, 1]} : vector<8x128xf32> to vector<1x128xf32>
    %27 = vector.extract_strided_slice %21 {offsets = [3, 0], sizes = [1, 128], strides = [1, 1]} : vector<8x128xf32> to vector<1x128xf32>
    %28 = vector.extract_strided_slice %21 {offsets = [4, 0], sizes = [1, 128], strides = [1, 1]} : vector<8x128xf32> to vector<1x128xf32>
    %29 = vector.extract_strided_slice %21 {offsets = [5, 0], sizes = [1, 128], strides = [1, 1]} : vector<8x128xf32> to vector<1x128xf32>
    %30 = vector.extract_strided_slice %21 {offsets = [6, 0], sizes = [1, 128], strides = [1, 1]} : vector<8x128xf32> to vector<1x128xf32>
    %31 = vector.extract_strided_slice %21 {offsets = [7, 0], sizes = [1, 128], strides = [1, 1]} : vector<8x128xf32> to vector<1x128xf32>
    %32 = vector.extract_strided_slice %23 {offsets = [0, 0], sizes = [8, 1], strides = [1, 1]} : vector<8x5xf32> to vector<8x1xf32>
    %33 = vector.extract_strided_slice %23 {offsets = [0, 1], sizes = [8, 1], strides = [1, 1]} : vector<8x5xf32> to vector<8x1xf32>
    %34 = vector.extract_strided_slice %23 {offsets = [0, 2], sizes = [8, 1], strides = [1, 1]} : vector<8x5xf32> to vector<8x1xf32>
    %35 = vector.extract_strided_slice %23 {offsets = [0, 3], sizes = [8, 1], strides = [1, 1]} : vector<8x5xf32> to vector<8x1xf32>
    %36 = vector.extract_strided_slice %23 {offsets = [0, 4], sizes = [8, 1], strides = [1, 1]} : vector<8x5xf32> to vector<8x1xf32>
    %cst_13 = arith.constant -1.000000e+00 : f32
    %37 = vector.broadcast %cst_13 : f32 to vector<8x1xf32>
    %38 = arith.cmpf one, %36, %37 : vector<8x1xf32>
    %39 = arith.subf %34, %32 : vector<8x1xf32>
    %40 = arith.subf %35, %33 : vector<8x1xf32>
    %41 = arith.mulf %39, %40 : vector<8x1xf32>
    %42 = vector.broadcast %26 : vector<1x128xf32> to vector<8x128xf32>
    %43 = vector.broadcast %34 : vector<8x1xf32> to vector<8x128xf32>
    %44 = arith.minimumf %42, %43 : vector<8x128xf32>
    %45 = vector.broadcast %24 : vector<1x128xf32> to vector<8x128xf32>
    %46 = vector.broadcast %32 : vector<8x1xf32> to vector<8x128xf32>
    %47 = arith.maximumf %45, %46 : vector<8x128xf32>
    %48 = arith.subf %44, %47 : vector<8x128xf32>
    %cst_14 = arith.constant 0.000000e+00 : f32
    %49 = vector.broadcast %cst_14 : f32 to vector<8x128xf32>
    %50 = arith.maximumf %48, %49 : vector<8x128xf32>
    %51 = vector.broadcast %27 : vector<1x128xf32> to vector<8x128xf32>
    %52 = vector.broadcast %35 : vector<8x1xf32> to vector<8x128xf32>
    %53 = arith.minimumf %51, %52 : vector<8x128xf32>
    %54 = vector.broadcast %25 : vector<1x128xf32> to vector<8x128xf32>
    %55 = vector.broadcast %33 : vector<8x1xf32> to vector<8x128xf32>
    %56 = arith.maximumf %54, %55 : vector<8x128xf32>
    %57 = arith.subf %53, %56 : vector<8x128xf32>
    %cst_15 = arith.constant 0.000000e+00 : f32
    %58 = vector.broadcast %cst_15 : f32 to vector<8x128xf32>
    %59 = arith.maximumf %57, %58 : vector<8x128xf32>
    %60 = arith.mulf %50, %59 : vector<8x128xf32>
    %61 = arith.mulf %28, %29 : vector<1x128xf32>
    %62 = vector.broadcast %61 : vector<1x128xf32> to vector<8x128xf32>
    %63 = vector.broadcast %41 : vector<8x1xf32> to vector<8x128xf32>
    %64 = arith.addf %62, %63 : vector<8x128xf32>
    %65 = arith.subf %64, %60 : vector<8x128xf32>
    %cst_16 = arith.constant 9.99999993E-9 : f32
    %66 = vector.broadcast %cst_16 : f32 to vector<8x128xf32>
    %67 = arith.maximumf %65, %66 : vector<8x128xf32>
    %68 = arith.divf %60, %67 : vector<8x128xf32>
    %cst_17 = arith.constant -1.000000e+00 : f32
    %69 = vector.shape_cast %38 : vector<8x1xi1> to vector<8x1xi1>
    %70 = vector.broadcast %69 : vector<8x1xi1> to vector<8x128xi1>
    %71 = vector.broadcast %cst_17 : f32 to vector<8x128xf32>
    %72 = arith.select %70, %68, %71 : vector<8x128xi1>, vector<8x128xf32>
    %cst_18 = arith.constant dense<0xFF800000> : vector<128xf32>
    %73 = vector.multi_reduction <maximumf>, %72, %cst_18 [0] : vector<8x128xf32> to vector<128xf32>
    %74 = vector.shape_cast %73 : vector<128xf32> to vector<1x128xf32>
    %75 = tpu.iota {dimensions = array<i32: 0>} : vector<8x128xi32>
    %76 = vector.broadcast %74 : vector<1x128xf32> to vector<8x128xf32>
    %77 = arith.cmpf oeq, %68, %76 : vector<8x128xf32>
    %78 = vector.broadcast %38 : vector<8x1xi1> to vector<8x128xi1>
    %79 = arith.andi %77, %78 : vector<8x128xi1>
    %c9_i32 = arith.constant 9 : i32
    %80 = vector.broadcast %c9_i32 : i32 to vector<8x128xi32>
    %81 = arith.select %79, %75, %80 : vector<8x128xi1>, vector<8x128xi32>
    %cst_19 = arith.constant dense<2147483647> : vector<128xi32>
    %82 = vector.multi_reduction <minsi>, %81, %cst_19 [0] : vector<8x128xi32> to vector<128xi32>
    %83 = vector.shape_cast %82 : vector<128xi32> to vector<1x128xi32>
    %84 = vector.broadcast %83 : vector<1x128xi32> to vector<8x128xi32>
    %85 = arith.cmpi eq, %75, %84 : vector<8x128xi32>
    %86 = arith.extui %85 : vector<8x128xi1> to vector<8x128xi32>
    %87 = arith.sitofp %86 : vector<8x128xi32> to vector<8x128xf32>
    %88 = vector.broadcast %32 : vector<8x1xf32> to vector<8x128xf32>
    %89 = arith.mulf %87, %88 : vector<8x128xf32>
    %cst_20 = arith.constant dense<0.000000e+00> : vector<128xf32>
    %90 = vector.multi_reduction <add>, %89, %cst_20 [0] : vector<8x128xf32> to vector<128xf32>
    %91 = vector.shape_cast %90 : vector<128xf32> to vector<1x128xf32>
    %92 = vector.broadcast %33 : vector<8x1xf32> to vector<8x128xf32>
    %93 = arith.mulf %87, %92 : vector<8x128xf32>
    %cst_21 = arith.constant dense<0.000000e+00> : vector<128xf32>
    %94 = vector.multi_reduction <add>, %93, %cst_21 [0] : vector<8x128xf32> to vector<128xf32>
    %95 = vector.shape_cast %94 : vector<128xf32> to vector<1x128xf32>
    %96 = vector.broadcast %34 : vector<8x1xf32> to vector<8x128xf32>
    %97 = arith.mulf %87, %96 : vector<8x128xf32>
    %cst_22 = arith.constant dense<0.000000e+00> : vector<128xf32>
    %98 = vector.multi_reduction <add>, %97, %cst_22 [0] : vector<8x128xf32> to vector<128xf32>
    %99 = vector.shape_cast %98 : vector<128xf32> to vector<1x128xf32>
    %100 = vector.broadcast %35 : vector<8x1xf32> to vector<8x128xf32>
    %101 = arith.mulf %87, %100 : vector<8x128xf32>
    %cst_23 = arith.constant dense<0.000000e+00> : vector<128xf32>
    %102 = vector.multi_reduction <add>, %101, %cst_23 [0] : vector<8x128xf32> to vector<128xf32>
    %103 = vector.shape_cast %102 : vector<128xf32> to vector<1x128xf32>
    %104 = vector.broadcast %36 : vector<8x1xf32> to vector<8x128xf32>
    %105 = arith.mulf %87, %104 : vector<8x128xf32>
    %cst_24 = arith.constant dense<0.000000e+00> : vector<128xf32>
    %106 = vector.multi_reduction <add>, %105, %cst_24 [0] : vector<8x128xf32> to vector<128xf32>
    %107 = vector.shape_cast %106 : vector<128xf32> to vector<1x128xf32>
    %cst_25 = arith.constant 6.000000e-01 : f32
    %108 = vector.broadcast %cst_25 : f32 to vector<1x128xf32>
    %109 = arith.cmpf oge, %74, %108 : vector<1x128xf32>
    %110 = arith.andi %109, %10 : vector<1x128xi1>
    %cst_26 = arith.constant 5.000000e-01 : f32
    %111 = vector.broadcast %cst_26 : f32 to vector<1x128xf32>
    %112 = arith.cmpf olt, %74, %111 : vector<1x128xf32>
    %113 = arith.ori %112, %110 : vector<1x128xi1>
    %114 = arith.andi %113, %10 : vector<1x128xi1>
    %cst_27 = arith.constant 1.000000e+00 : f32
    %115 = vector.broadcast %cst_27 : f32 to vector<4x128xf32>
    %116 = arith.subf %115, %17 : vector<4x128xf32>
    %117 = math.log %116 : vector<4x128xf32>
    %cst_28 = arith.constant 0.000000e+00 : f32
    %118 = vector.broadcast %cst_28 : f32 to vector<4x128xf32>
    %119 = arith.subf %118, %117 : vector<4x128xf32>
    %120 = arith.mulf %17, %17 : vector<4x128xf32>
    %121 = arith.mulf %120, %119 : vector<4x128xf32>
    %cst_29 = arith.constant dense<0.000000e+00> : vector<128xf32>
    %122 = vector.multi_reduction <add>, %121, %cst_29 [0] : vector<4x128xf32> to vector<128xf32>
    %123 = vector.shape_cast %122 : vector<128xf32> to vector<1x128xf32>
    %cst_30 = arith.constant 7.500000e-01 : f32
    %124 = vector.broadcast %cst_30 : f32 to vector<1x128xf32>
    %125 = arith.mulf %124, %123 : vector<1x128xf32>
    %126 = tpu.iota {dimensions = array<i32: 0>} : vector<4x128xi32>
    %127 = arith.fptosi %107 : vector<1x128xf32> to vector<1x128xi32>
    %128 = vector.broadcast %127 : vector<1x128xi32> to vector<4x128xi32>
    %129 = arith.cmpi eq, %126, %128 : vector<4x128xi32>
    %130 = arith.extui %129 : vector<4x128xi1> to vector<4x128xi32>
    %131 = arith.sitofp %130 : vector<4x128xi32> to vector<4x128xf32>
    %132 = arith.mulf %131, %17 : vector<4x128xf32>
    %cst_31 = arith.constant dense<0.000000e+00> : vector<128xf32>
    %133 = vector.multi_reduction <add>, %132, %cst_31 [0] : vector<4x128xf32> to vector<128xf32>
    %134 = vector.shape_cast %133 : vector<128xf32> to vector<1x128xf32>
    %135 = arith.mulf %131, %121 : vector<4x128xf32>
    %cst_32 = arith.constant dense<0.000000e+00> : vector<128xf32>
    %136 = vector.multi_reduction <add>, %135, %cst_32 [0] : vector<4x128xf32> to vector<128xf32>
    %137 = vector.shape_cast %136 : vector<128xf32> to vector<1x128xf32>
    %cst_33 = arith.constant 7.500000e-01 : f32
    %138 = vector.broadcast %cst_33 : f32 to vector<1x128xf32>
    %139 = arith.mulf %138, %137 : vector<1x128xf32>
    %cst_34 = arith.constant 1.000000e+00 : f32
    %140 = vector.broadcast %cst_34 : f32 to vector<1x128xf32>
    %141 = arith.subf %140, %134 : vector<1x128xf32>
    %cst_35 = arith.constant 2.500000e-01 : f32
    %142 = vector.broadcast %cst_35 : f32 to vector<1x128xf32>
    %143 = arith.mulf %142, %141 : vector<1x128xf32>
    %cst_36 = arith.constant 1.000000e+00 : f32
    %144 = vector.broadcast %cst_36 : f32 to vector<1x128xf32>
    %145 = arith.subf %144, %134 : vector<1x128xf32>
    %146 = arith.mulf %143, %145 : vector<1x128xf32>
    %147 = math.log %134 : vector<1x128xf32>
    %cst_37 = arith.constant 0.000000e+00 : f32
    %148 = vector.broadcast %cst_37 : f32 to vector<1x128xf32>
    %149 = arith.subf %148, %147 : vector<1x128xf32>
    %150 = arith.mulf %146, %149 : vector<1x128xf32>
    %cst_38 = arith.constant 0.000000e+00 : f32
    %151 = vector.broadcast %cst_38 : f32 to vector<1x128xf32>
    %152 = arith.select %114, %125, %151 : vector<1x128xi1>, vector<1x128xf32>
    %153 = arith.subf %150, %139 : vector<1x128xf32>
    %cst_39 = arith.constant 0.000000e+00 : f32
    %154 = vector.broadcast %cst_39 : f32 to vector<1x128xf32>
    %155 = arith.select %110, %153, %154 : vector<1x128xi1>, vector<1x128xf32>
    %156 = arith.addf %152, %155 : vector<1x128xf32>
    %157 = arith.subf %99, %91 : vector<1x128xf32>
    %158 = arith.subf %103, %95 : vector<1x128xf32>
    %cst_40 = arith.constant 5.000000e-01 : f32
    %159 = vector.broadcast %cst_40 : f32 to vector<1x128xf32>
    %160 = arith.mulf %159, %157 : vector<1x128xf32>
    %161 = arith.addf %91, %160 : vector<1x128xf32>
    %cst_41 = arith.constant 5.000000e-01 : f32
    %162 = vector.broadcast %cst_41 : f32 to vector<1x128xf32>
    %163 = arith.mulf %162, %158 : vector<1x128xf32>
    %164 = arith.addf %95, %163 : vector<1x128xf32>
    %cst_42 = arith.constant 1.000000e+00 : f32
    %165 = vector.broadcast %cst_42 : f32 to vector<1x128xf32>
    %166 = arith.maximumf %157, %165 : vector<1x128xf32>
    %cst_43 = arith.constant 1.000000e+00 : f32
    %167 = vector.broadcast %cst_43 : f32 to vector<1x128xf32>
    %168 = arith.maximumf %158, %167 : vector<1x128xf32>
    %169 = arith.subf %161, %30 : vector<1x128xf32>
    %170 = arith.divf %169, %28 : vector<1x128xf32>
    %171 = arith.subf %164, %31 : vector<1x128xf32>
    %172 = arith.divf %171, %29 : vector<1x128xf32>
    %173 = arith.divf %166, %28 : vector<1x128xf32>
    %174 = math.log %173 : vector<1x128xf32>
    %175 = arith.divf %168, %29 : vector<1x128xf32>
    %176 = math.log %175 : vector<1x128xf32>
    %177 = vector.extract_strided_slice %20 {offsets = [0, 0], sizes = [1, 128], strides = [1, 1]} : vector<4x128xf32> to vector<1x128xf32>
    %178 = arith.subf %170, %177 : vector<1x128xf32>
    %179 = math.absf %178 : vector<1x128xf32>
    %180 = vector.extract_strided_slice %20 {offsets = [1, 0], sizes = [1, 128], strides = [1, 1]} : vector<4x128xf32> to vector<1x128xf32>
    %181 = arith.subf %172, %180 : vector<1x128xf32>
    %182 = math.absf %181 : vector<1x128xf32>
    %183 = vector.extract_strided_slice %20 {offsets = [2, 0], sizes = [1, 128], strides = [1, 1]} : vector<4x128xf32> to vector<1x128xf32>
    %184 = arith.subf %174, %183 : vector<1x128xf32>
    %185 = math.absf %184 : vector<1x128xf32>
    %186 = vector.extract_strided_slice %20 {offsets = [3, 0], sizes = [1, 128], strides = [1, 1]} : vector<4x128xf32> to vector<1x128xf32>
    %187 = arith.subf %176, %186 : vector<1x128xf32>
    %188 = math.absf %187 : vector<1x128xf32>
    %cst_44 = arith.constant 1.000000e+00 : f32
    %189 = vector.broadcast %cst_44 : f32 to vector<1x128xf32>
    %190 = arith.cmpf ole, %179, %189 : vector<1x128xf32>
    %cst_45 = arith.constant 5.000000e-01 : f32
    %191 = vector.broadcast %cst_45 : f32 to vector<1x128xf32>
    %192 = arith.mulf %191, %179 : vector<1x128xf32>
    %193 = arith.mulf %192, %179 : vector<1x128xf32>
    %cst_46 = arith.constant 1.000000e+00 : f32
    %194 = vector.broadcast %cst_46 : f32 to vector<1x128xf32>
    %195 = arith.divf %193, %194 : vector<1x128xf32>
    %cst_47 = arith.constant 5.000000e-01 : f32
    %196 = vector.broadcast %cst_47 : f32 to vector<1x128xf32>
    %197 = arith.subf %179, %196 : vector<1x128xf32>
    %198 = arith.select %190, %195, %197 : vector<1x128xi1>, vector<1x128xf32>
    %cst_48 = arith.constant 1.000000e+00 : f32
    %199 = vector.broadcast %cst_48 : f32 to vector<1x128xf32>
    %200 = arith.cmpf ole, %182, %199 : vector<1x128xf32>
    %cst_49 = arith.constant 5.000000e-01 : f32
    %201 = vector.broadcast %cst_49 : f32 to vector<1x128xf32>
    %202 = arith.mulf %201, %182 : vector<1x128xf32>
    %203 = arith.mulf %202, %182 : vector<1x128xf32>
    %cst_50 = arith.constant 1.000000e+00 : f32
    %204 = vector.broadcast %cst_50 : f32 to vector<1x128xf32>
    %205 = arith.divf %203, %204 : vector<1x128xf32>
    %cst_51 = arith.constant 5.000000e-01 : f32
    %206 = vector.broadcast %cst_51 : f32 to vector<1x128xf32>
    %207 = arith.subf %182, %206 : vector<1x128xf32>
    %208 = arith.select %200, %205, %207 : vector<1x128xi1>, vector<1x128xf32>
    %209 = arith.addf %198, %208 : vector<1x128xf32>
    %cst_52 = arith.constant 1.000000e+00 : f32
    %210 = vector.broadcast %cst_52 : f32 to vector<1x128xf32>
    %211 = arith.cmpf ole, %185, %210 : vector<1x128xf32>
    %cst_53 = arith.constant 5.000000e-01 : f32
    %212 = vector.broadcast %cst_53 : f32 to vector<1x128xf32>
    %213 = arith.mulf %212, %185 : vector<1x128xf32>
    %214 = arith.mulf %213, %185 : vector<1x128xf32>
    %cst_54 = arith.constant 1.000000e+00 : f32
    %215 = vector.broadcast %cst_54 : f32 to vector<1x128xf32>
    %216 = arith.divf %214, %215 : vector<1x128xf32>
    %cst_55 = arith.constant 5.000000e-01 : f32
    %217 = vector.broadcast %cst_55 : f32 to vector<1x128xf32>
    %218 = arith.subf %185, %217 : vector<1x128xf32>
    %219 = arith.select %211, %216, %218 : vector<1x128xi1>, vector<1x128xf32>
    %220 = arith.addf %209, %219 : vector<1x128xf32>
    %cst_56 = arith.constant 1.000000e+00 : f32
    %221 = vector.broadcast %cst_56 : f32 to vector<1x128xf32>
    %222 = arith.cmpf ole, %188, %221 : vector<1x128xf32>
    %cst_57 = arith.constant 5.000000e-01 : f32
    %223 = vector.broadcast %cst_57 : f32 to vector<1x128xf32>
    %224 = arith.mulf %223, %188 : vector<1x128xf32>
    %225 = arith.mulf %224, %188 : vector<1x128xf32>
    %cst_58 = arith.constant 1.000000e+00 : f32
    %226 = vector.broadcast %cst_58 : f32 to vector<1x128xf32>
    %227 = arith.divf %225, %226 : vector<1x128xf32>
    %cst_59 = arith.constant 5.000000e-01 : f32
    %228 = vector.broadcast %cst_59 : f32 to vector<1x128xf32>
    %229 = arith.subf %188, %228 : vector<1x128xf32>
    %230 = arith.select %222, %227, %229 : vector<1x128xi1>, vector<1x128xf32>
    %231 = arith.addf %220, %230 : vector<1x128xf32>
    %cst_60 = arith.constant 0.000000e+00 : f32
    %232 = vector.broadcast %cst_60 : f32 to vector<1x128xf32>
    %233 = arith.select %110, %231, %232 : vector<1x128xi1>, vector<1x128xf32>
    %c0_61 = arith.constant 0 : index
    %c0_62 = arith.constant 0 : index
    %234 = vector.load %arg8[%c0_61, %c0_62] : memref<8x128xf32, #tpu.memory_space<vmem>>, vector<1x128xf32>
    %235 = arith.addf %234, %156 : vector<1x128xf32>
    %c0_63 = arith.constant 0 : index
    %c0_64 = arith.constant 0 : index
    %236 = vector.load %arg8[%c0_63, %c0_64] : memref<8x128xf32, #tpu.memory_space<vmem>>, vector<1x128xf32>
    tpu.vector_store %arg8[%c0_63, %c0_64], %235 {strides = array<i32>} : memref<8x128xf32, #tpu.memory_space<vmem>>, vector<1x128xf32>,
    %c1 = arith.constant 1 : index
    %c0_65 = arith.constant 0 : index
    %237 = vector.load %arg8[%c1, %c0_65] : memref<8x128xf32, #tpu.memory_space<vmem>>, vector<1x128xf32>
    %238 = arith.addf %237, %233 : vector<1x128xf32>
    %c1_66 = arith.constant 1 : index
    %c0_67 = arith.constant 0 : index
    %239 = vector.load %arg8[%c1_66, %c0_67] : memref<8x128xf32, #tpu.memory_space<vmem>>, vector<1x128xf32>
    tpu.vector_store %arg8[%c1_66, %c0_67], %238 {strides = array<i32>} : memref<8x128xf32, #tpu.memory_space<vmem>>, vector<1x128xf32>,
    %c2 = arith.constant 2 : index
    %c0_68 = arith.constant 0 : index
    %240 = vector.load %arg8[%c2, %c0_68] : memref<8x128xf32, #tpu.memory_space<vmem>>, vector<1x128xf32>
    %241 = arith.extui %110 : vector<1x128xi1> to vector<1x128xi32>
    %242 = arith.sitofp %241 : vector<1x128xi32> to vector<1x128xf32>
    %243 = arith.addf %240, %242 : vector<1x128xf32>
    %c2_69 = arith.constant 2 : index
    %c0_70 = arith.constant 0 : index
    %244 = vector.load %arg8[%c2_69, %c0_70] : memref<8x128xf32, #tpu.memory_space<vmem>>, vector<1x128xf32>
    tpu.vector_store %arg8[%c2_69, %c0_70], %243 {strides = array<i32>} : memref<8x128xf32, #tpu.memory_space<vmem>>, vector<1x128xf32>,
    %c0_i32_71 = arith.constant 0 : i32
    %245 = arith.cmpi eq, %arg2, %c0_i32_71 : i32
    %246 = arith.extui %245 : i1 to i32
    %c0_i32_72 = arith.constant 0 : i32
    %247 = arith.cmpi ne, %246, %c0_i32_72 : i32
    scf.if %247 {
      %c0_73 = arith.constant 0 : index
      %c0_74 = arith.constant 0 : index
      %248 = vector.load %arg8[%c0_73, %c0_74] : memref<8x128xf32, #tpu.memory_space<vmem>>, vector<8x128xf32>
      %cst_75 = arith.constant dense<0.000000e+00> : vector<8xf32>
      %249 = vector.multi_reduction <add>, %248, %cst_75 [1] : vector<8x128xf32> to vector<8xf32>
      %250 = vector.shape_cast %249 : vector<8xf32> to vector<8x1xf32>
      %251 = vector.shape_cast %250 : vector<8x1xf32> to vector<8x1xf32>
      %252 = vector.broadcast %251 : vector<8x1xf32> to vector<8x128xf32>
      %253 = vector.shape_cast %252 : vector<8x128xf32> to vector<1x1x8x128xf32>
      %c0_76 = arith.constant 0 : index
      %c0_77 = arith.constant 0 : index
      %c0_78 = arith.constant 0 : index
      %c0_79 = arith.constant 0 : index
      %254 = vector.load %arg7[%c0_76, %c0_77, %c0_78, %c0_79] : memref<1x1x8x128xf32, #tpu.memory_space<vmem>>, vector<1x1x8x128xf32>
      tpu.vector_store %arg7[%c0_76, %c0_77, %c0_78, %c0_79], %253 {strides = array<i32>} : memref<1x1x8x128xf32, #tpu.memory_space<vmem>>, vector<1x1x8x128xf32>,
    } else {
    }
    return
  }
  func.func @transform_0(%arg0: i32, %arg1: i32, %arg2: i32) -> (i32, i32, i32) {
    %c1_i32 = arith.constant 1 : i32
    %0 = arith.muli %arg0, %c1_i32 : i32
    %1 = arith.addi %0, %arg2 : i32
    %c0_i32 = arith.constant 0 : i32
    %c0_i32_0 = arith.constant 0 : i32
    return %arg1, %1, %c0_i32 : i32, i32, i32
  }
  func.func @transform_1(%arg0: i32, %arg1: i32, %arg2: i32) -> (i32, i32, i32) {
    %c1_i32 = arith.constant 1 : i32
    %0 = arith.muli %arg0, %c1_i32 : i32
    %1 = arith.addi %0, %arg2 : i32
    %c0_i32 = arith.constant 0 : i32
    %c0_i32_0 = arith.constant 0 : i32
    return %arg1, %1, %c0_i32 : i32, i32, i32
  }
  func.func @transform_2(%arg0: i32, %arg1: i32, %arg2: i32) -> (i32, i32) {
    %c1_i32 = arith.constant 1 : i32
    %0 = arith.muli %arg0, %c1_i32 : i32
    %1 = arith.addi %0, %arg2 : i32
    %c0_i32 = arith.constant 0 : i32
    %c0_i32_0 = arith.constant 0 : i32
    return %c0_i32, %1 : i32, i32
  }
  func.func @transform_3(%arg0: i32, %arg1: i32, %arg2: i32) -> (i32, i32, i32) {
    %c0_i32 = arith.constant 0 : i32
    %c0_i32_0 = arith.constant 0 : i32
    %c0_i32_1 = arith.constant 0 : i32
    return %arg1, %c0_i32, %c0_i32_0 : i32, i32, i32
  }
  func.func @transform_4(%arg0: i32, %arg1: i32, %arg2: i32) -> (i32, i32, i32, i32) {
    %c0_i32 = arith.constant 0 : i32
    %c0_i32_0 = arith.constant 0 : i32
    %c0_i32_1 = arith.constant 0 : i32
    return %arg0, %arg1, %c0_i32, %c0_i32_0 : i32, i32, i32, i32
  }
}

</mosaic_0001>

<llo_original>
// kernel: tpu_custom_call.1
$region0: #{tpu_custom_call.1}
  #allocation0 [shape = 'u32[]', space=smem, size = 0x4, offset = 0x4, fixed_abs, tag = 'smem constant byte address 0x4 - core index']
  #allocation1 [shape = 'u32[144,128]{1,0:T(1,128)}', space=vmem, size = 0x12000, scoped, tag = 'internal scratch']
  #allocation2 [shape = 'f32[8,128]{1,0:T(8,128)}', space=vmem, size = 0x1000, scoped, tag = 'scratch operand']
  %s0 = inlined_call_operand.vmem [shape: f32[2,128,4], index: 0, kind: input, shape index: {}]
  %s1 = inlined_call_operand.vmem [shape: f32[2,128,4], index: 1, kind: input, shape index: {}]
  %s2 = inlined_call_operand.vmem [shape: f32[8,128], index: 2, kind: input, shape index: {}]
  %s3 = inlined_call_operand.vmem [shape: f32[2,8,5], index: 3, kind: input, shape index: {}]
  %s4 = inlined_call_operand.hbm [shape: f32[1,2,8,128], index: 4, kind: output, shape index: {}]
  %s5 = sld [smem:[#allocation0]]
  $region57: #{tpu_custom_call.1} parent=0
    _
  %s7 = ssub.s32 1, %s5
  %s8 = scalar_select 0, %s7, %s5
  $region1: #{tpu_custom_call.1} parent=0
    #allocation3 [shape = 'u8[8192]{0}', space=vmem, size = 0x2000, scoped, tag = 'output window, operand 0']
    #allocation4 [shape = 's32[2]{0}', space=sflag, size = 0x8, scoped, tag = 'scoped memory for tpu_custom_call.1']
    %9 = vsyncpa [#allocation4], 0
    %s10 = scalar_lea.sflag [#allocation4], 1
    %11 = vsyncpa %s10, 0
    loop: start=0, step=1, limit=4
    $region2: #{tpu_custom_call.1} parent=1 // loop_pre_header
      _
    $region3: #{tpu_custom_call.1} parent=1 // loop_header
      %s13 = sphi 0, %s17
      %p14 = scmp.ge.s32.totalorder %s13, 4
      %s20 = sphi 0, %s39
      %s21 = sphi 0, %s35
      %s22 = sphi 0, %s31
      %s23 = sphi 0, %s20
      %s24 = sphi 0, %s21
      %s25 = sphi 0, %s22
      %s26 = sphi 0, %s23
      %s27 = sphi 0, %s24
      %s28 = sphi 0, %s25
      %s46 = sphi 0, %s48
      %s49 = sphi 0, %s46
      %s50 = sphi 0, %s49
      %s66 = sphi 0, %s50
      %s76 = sphi 0, %s78
      %s79 = sphi 0, %s76
      %s80 = sphi 0, %s79
      %s96 = sphi 0, %s80
      %s104 = sphi 0, %s106
      %s107 = sphi 0, %s104
      %s108 = sphi 0, %s107
      %s124 = sphi 0, %s108
      %s130 = sphi 0, %s132
      %s133 = sphi 0, %s130
      %s134 = sphi 0, %s133
      %s150 = sphi 0, %s134
      %s158 = sphi 0, %s160
      %s161 = sphi 0, %s158
      %s162 = sphi 0, %s161
      %s178 = sphi 0, %s162
    $region4: #{tpu_custom_call.1} parent=1 // loop_header_branch
      %16 = sbr.rel (%p14) target = $region8
    $region5: #{tpu_custom_call.1} parent=1 // loop_body
      %s18 = ssub.s32 %s13, 1
      %s19 = ssub.s32 %s13, 2
      %s29 = sadd.s32 1, %s22
      %p30 = scmp.ge.s32.totalorder %s29, 1
      %s31 = scalar_select %p30, 0, %s29
      %s32 = sadd.s32 1, %s21
      %s33 = scalar_select %p30, %s32, %s21
      %p34 = scmp.ge.s32.totalorder %s33, 2
      %s35 = scalar_select %p34, 0, %s33
      %s36 = sadd.s32 1, %s20
      %s37 = scalar_select %p34, %s36, %s20
      %p38 = scmp.ge.s32.totalorder %s37, 1
      %s39 = scalar_select %p38, 0, %s37
      %s40 = sadd.s32 %s20, %s22
      %s41 = sadd.s32 %s39, %s31
      %s42 = ssub.s32 %s21, %s35
      %s43 = ssub.s32 %s40, %s41
      %s44 = sor.u32 %s42, %s43
      %p45 = scmp.eq.s32.totalorder %s44, 0
      %s47 = sadd.s32 %s46, 1
      %s48 = scalar_select %p45, %s46, %s47
      %p51 = pneg %p45
      %p52 = scmp.eq.s32.totalorder %s13, 1
      %p53 = por %p51, %p52
      %p54 = scmp.ne.s32.totalorder %s46, %s49
      %p55 = scmp.eq.s32.totalorder %s13, 0
      %p56 = por %p54, %p55
      %p57 = scmp.ne.s32.totalorder %s46, %s49
      %p58 = scmp.eq.s32.totalorder %s18, 1
      %p59 = por %p57, %p58
      %p60 = scmp.ne.s32.totalorder %s49, %s50
      %p61 = scmp.eq.s32.totalorder %s18, 0
      %p62 = por %p60, %p61
      %p63 = scmp.ne.s32.totalorder %s49, %s50
      %p64 = scmp.eq.s32.totalorder %s19, 1
      %p65 = por %p63, %p64
      %p67 = scmp.ne.s32.totalorder %s50, %s66
      %p68 = scmp.eq.s32.totalorder %s19, 0
      %p69 = por %p67, %p68
      %s70 = sadd.s32 %s20, %s22
      %s71 = sadd.s32 %s39, %s31
      %s72 = ssub.s32 %s21, %s35
      %s73 = ssub.s32 %s70, %s71
      %s74 = sor.u32 %s72, %s73
      %p75 = scmp.eq.s32.totalorder %s74, 0
      %s77 = sadd.s32 %s76, 1
      %s78 = scalar_select %p75, %s76, %s77
      %p81 = pneg %p75
      %p82 = scmp.eq.s32.totalorder %s13, 1
      %p83 = por %p81, %p82
      %p84 = scmp.ne.s32.totalorder %s76, %s79
      %p85 = scmp.eq.s32.totalorder %s13, 0
      %p86 = por %p84, %p85
      %p87 = scmp.ne.s32.totalorder %s76, %s79
      %p88 = scmp.eq.s32.totalorder %s18, 1
      %p89 = por %p87, %p88
      %p90 = scmp.ne.s32.totalorder %s79, %s80
      %p91 = scmp.eq.s32.totalorder %s18, 0
      %p92 = por %p90, %p91
      %p93 = scmp.ne.s32.totalorder %s79, %s80
      %p94 = scmp.eq.s32.totalorder %s19, 1
      %p95 = por %p93, %p94
      %p97 = scmp.ne.s32.totalorder %s80, %s96
      %p98 = scmp.eq.s32.totalorder %s19, 0
      %p99 = por %p97, %p98
      %s100 = sadd.s32 %s20, %s22
      %s101 = sadd.s32 %s39, %s31
      %s102 = ssub.s32 %s100, %s101
      %p103 = scmp.eq.s32.totalorder %s102, 0
      %s105 = sadd.s32 %s104, 1
      %s106 = scalar_select %p103, %s104, %s105
      %p109 = pneg %p103
      %p110 = scmp.eq.s32.totalorder %s13, 1
      %p111 = por %p109, %p110
      %p112 = scmp.ne.s32.totalorder %s104, %s107
      %p113 = scmp.eq.s32.totalorder %s13, 0
      %p114 = por %p112, %p113
      %p115 = scmp.ne.s32.totalorder %s104, %s107
      %p116 = scmp.eq.s32.totalorder %s18, 1
      %p117 = por %p115, %p116
      %p118 = scmp.ne.s32.totalorder %s107, %s108
      %p119 = scmp.eq.s32.totalorder %s18, 0
      %p120 = por %p118, %p119
      %p121 = scmp.ne.s32.totalorder %s107, %s108
      %p122 = scmp.eq.s32.totalorder %s19, 1
      %p123 = por %p121, %p122
      %p125 = scmp.ne.s32.totalorder %s108, %s124
      %p126 = scmp.eq.s32.totalorder %s19, 0
      %p127 = por %p125, %p126
      %s128 = ssub.s32 %s21, %s35
      %p129 = scmp.eq.s32.totalorder %s128, 0
      %s131 = sadd.s32 %s130, 1
      %s132 = scalar_select %p129, %s130, %s131
      %p135 = pneg %p129
      %p136 = scmp.eq.s32.totalorder %s13, 1
      %p137 = por %p135, %p136
      %p138 = scmp.ne.s32.totalorder %s130, %s133
      %p139 = scmp.eq.s32.totalorder %s13, 0
      %p140 = por %p138, %p139
      %p141 = scmp.ne.s32.totalorder %s130, %s133
      %p142 = scmp.eq.s32.totalorder %s18, 1
      %p143 = por %p141, %p142
      %p144 = scmp.ne.s32.totalorder %s133, %s134
      %p145 = scmp.eq.s32.totalorder %s18, 0
      %p146 = por %p144, %p145
      %p147 = scmp.ne.s32.totalorder %s133, %s134
      %p148 = scmp.eq.s32.totalorder %s19, 1
      %p149 = por %p147, %p148
      %p151 = scmp.ne.s32.totalorder %s134, %s150
      %p152 = scmp.eq.s32.totalorder %s19, 0
      %p153 = por %p151, %p152
      %s154 = ssub.s32 %s20, %s39
      %s155 = ssub.s32 %s21, %s35
      %s156 = sor.u32 %s154, %s155
      %p157 = scmp.eq.s32.totalorder %s156, 0
      %s159 = sadd.s32 %s158, 1
      %s160 = scalar_select %p157, %s158, %s159
      %p163 = pneg %p157
      %p164 = scmp.eq.s32.totalorder %s13, 1
      %p165 = por %p163, %p164
      %p166 = scmp.ne.s32.totalorder %s158, %s161
      %p167 = scmp.eq.s32.totalorder %s13, 0
      %p168 = por %p166, %p167
      %p169 = scmp.ne.s32.totalorder %s158, %s161
      %p170 = scmp.eq.s32.totalorder %s18, 1
      %p171 = por %p169, %p170
      %p172 = scmp.ne.s32.totalorder %s161, %s162
      %p173 = scmp.eq.s32.totalorder %s18, 0
      %p174 = por %p172, %p173
      %p175 = scmp.ne.s32.totalorder %s161, %s162
      %p176 = scmp.eq.s32.totalorder %s19, 1
      %p177 = por %p175, %p176
      %p179 = scmp.ne.s32.totalorder %s162, %s178
      %p180 = scmp.eq.s32.totalorder %s19, 0
      %p181 = por %p179, %p180
      %p182 = scmp.le.s32.totalorder 1, %s13
      %p183 = scmp.lt.s32.totalorder %s13, 3
      %p184 = pnand %p182, %p183
      %p185 = pneg %p184
      // Predicated region
      $region9: #{tpu_custom_call.1} parent=5 // pred_check
        _
      $region10: #{tpu_custom_call.1} parent=5 // pred_check_branch
        %187 = sbr.rel (%p184) target = $region12
      $region11: #{tpu_custom_call.1} parent=5 // pred_region
        %s188 = ssub.s32 %s13, 1
        // Predicated region
        $region13: #{tpu_custom_call.1} parent=11 // pred_check
          %p189 = pneg %p120
        $region14: #{tpu_custom_call.1} parent=11 // pred_check_branch
          %191 = sbr.rel (%p189) target = $region16
        $region15: #{tpu_custom_call.1} parent=11 // pred_region
          %s192 = sadd.s32 %s23, %s25
          %p193 = scmp.lt.s32.totalorder %s192, 0
          %s194 = scalar_select %p193, %s192, 0
          %s195 = smul.addr %s194, 8
          %s196 = scalar_lea.vmem %s2, %s195
          %s197 = sadd.s32 %s23, %s25
        $region16: #{tpu_custom_call.1} parent=11 // pred_fallthru
          _
      $region12: #{tpu_custom_call.1} parent=5 // pred_fallthru
        _
      %p198 = scmp.lt.s32.totalorder %s13, 2
      // Predicated region
      $region17: #{tpu_custom_call.1} parent=5 // pred_check
        %p199 = pneg %p198
      $region18: #{tpu_custom_call.1} parent=5 // pred_check_branch
        %201 = sbr.rel (%p199) target = $region20
      $region19: #{tpu_custom_call.1} parent=5 // pred_region
        // Predicated region
        $region21: #{tpu_custom_call.1} parent=19 // pred_check
          %p202 = pneg %p56
        $region22: #{tpu_custom_call.1} parent=19 // pred_check_branch
          %204 = sbr.rel (%p202) target = $region24
        $region23: #{tpu_custom_call.1} parent=19 // pred_region
          %s205 = sadd.s32 %s20, %s22
          %s206 = smul.u32 16, %s205
          %p207 = scmp.lt.s32.totalorder %s21, 1
          %s208 = scalar_select %p207, %s21, 1
          %p209 = scmp.lt.s32.totalorder %s206, 15
          %s210 = scalar_select %p209, %s206, 15
          %s211 = smul.addr %s208, 16
          %s212 = sadd.s32 %s210, %s211
          %s213 = smul.addr %s212, 8
          %s214 = scalar_lea.vmem %s0, %s213
          %s215 = sadd.s32 %s20, %s22
          %s216 = smul.u32 16, %s215
        $region24: #{tpu_custom_call.1} parent=19 // pred_fallthru
          _
        // Predicated region
        $region25: #{tpu_custom_call.1} parent=19 // pred_check
          %p217 = pneg %p86
        $region26: #{tpu_custom_call.1} parent=19 // pred_check_branch
          %219 = sbr.rel (%p217) target = $region28
        $region27: #{tpu_custom_call.1} parent=19 // pred_region
          %s220 = sadd.s32 %s20, %s22
          %s221 = smul.u32 16, %s220
          %p222 = scmp.lt.s32.totalorder %s21, 1
          %s223 = scalar_select %p222, %s21, 1
          %p224 = scmp.lt.s32.totalorder %s221, 15
          %s225 = scalar_select %p224, %s221, 15
          %s226 = smul.addr %s223, 16
          %s227 = sadd.s32 %s225, %s226
          %s228 = smul.addr %s227, 8
          %s229 = scalar_lea.vmem %s1, %s228
          %s230 = sadd.s32 %s20, %s22
          %s231 = smul.u32 16, %s230
        $region28: #{tpu_custom_call.1} parent=19 // pred_fallthru
          _
        // Predicated region
        $region29: #{tpu_custom_call.1} parent=19 // pred_check
          %p232 = pneg %p140
        $region30: #{tpu_custom_call.1} parent=19 // pred_check_branch
          %234 = sbr.rel (%p232) target = $region32
        $region31: #{tpu_custom_call.1} parent=19 // pred_region
          %p235 = scmp.lt.s32.totalorder %s21, 1
          %s236 = scalar_select %p235, %s21, 1
          %s237 = smul.addr %s236, 8
          %s238 = scalar_lea.vmem %s3, %s237
        $region32: #{tpu_custom_call.1} parent=19 // pred_fallthru
          _
      $region20: #{tpu_custom_call.1} parent=5 // pred_fallthru
        _
      %p239 = scmp.le.s32.totalorder 1, %s13
      %p240 = scmp.lt.s32.totalorder %s13, 3
      %p241 = pnand %p239, %p240
      %p242 = pneg %p241
      // Predicated region
      $region33: #{tpu_custom_call.1} parent=5 // pred_check
        _
      $region34: #{tpu_custom_call.1} parent=5 // pred_check_branch
        %244 = sbr.rel (%p241) target = $region36
      $region35: #{tpu_custom_call.1} parent=5 // pred_region
        %s245 = ssub.s32 %s13, 1
        %s246 = sadd.s32 %s23, %s25
        %s247 = smul.u32 16, %s246
        %p248 = scmp.lt.s32.totalorder %s24, 1
        %s249 = scalar_select %p248, %s24, 1
        %p250 = scmp.lt.s32.totalorder %s247, 15
        %s251 = scalar_select %p250, %s247, 15
        %s252 = smul.addr %s249, 16
        %s253 = sadd.s32 %s251, %s252
        %s254 = smul.addr %s253, 8
        %s255 = scalar_lea.vmem %s0, %s254
        %p256 = pneg %p62
        %p257 = pneg %p59
        %s258 = sadd.s32 %s23, %s25
        %s259 = smul.u32 16, %s258
        %p260 = scmp.lt.s32.totalorder %s24, 1
        %s261 = scalar_select %p260, %s24, 1
        %p262 = scmp.lt.s32.totalorder %s259, 15
        %s263 = scalar_select %p262, %s259, 15
        %s264 = smul.addr %s261, 16
        %s265 = sadd.s32 %s263, %s264
        %s266 = smul.addr %s265, 8
        %s267 = scalar_lea.vmem %s1, %s266
        %p268 = pneg %p92
        %p269 = pneg %p89
        %s270 = sadd.s32 %s23, %s25
        %p271 = scmp.lt.s32.totalorder %s270, 0
        %s272 = scalar_select %p271, %s270, 0
        %s273 = smul.addr %s272, 8
        %s274 = scalar_lea.vmem %s2, %s273
        %p275 = pneg %p120
        %p276 = pneg %p117
        %p277 = scmp.lt.s32.totalorder %s24, 1
        %s278 = scalar_select %p277, %s24, 1
        %s279 = smul.addr %s278, 8
        %s280 = scalar_lea.vmem %s3, %s279
        %p281 = pneg %p146
        %p282 = pneg %p143
        %p283 = pneg %p174
        %p284 = pneg %p171
        %s285 = sand.u32 %s161, 1
        %s286 = scalar_lea.sflag [#allocation4], %s285
        %s287 = sand.u32 %s161, 1
        %s288 = smul.addr %s287, 8
        %s289 = scalar_lea.vmem [#allocation3], %s288
        %s290 = sadd.s32 %s23, %s25
        %s291 = smul.u32 16, %s290
        %p292 = scmp.lt.s32.totalorder %s24, 1
        %s293 = scalar_select %p292, %s24, 1
        %p294 = scmp.lt.s32.totalorder %s291, 15
        %s295 = scalar_select %p294, %s291, 15
        %s296 = smul.addr %s293, 16
        %s297 = sadd.s32 %s295, %s296
        %s298 = smul.addr %s297, 8
        %s299 = scalar_lea.vmem %s0, %s298
        %s300 = sadd.s32 %s23, %s25
        %s301 = smul.u32 16, %s300
        %s302 = sadd.s32 %s23, %s25
        %s303 = smul.u32 16, %s302
        %p304 = scmp.lt.s32.totalorder %s24, 1
        %s305 = scalar_select %p304, %s24, 1
        %p306 = scmp.lt.s32.totalorder %s303, 15
        %s307 = scalar_select %p306, %s303, 15
        %s308 = smul.addr %s305, 16
        %s309 = sadd.s32 %s307, %s308
        %s310 = smul.addr %s309, 8
        %s311 = scalar_lea.vmem %s1, %s310
        %s312 = sadd.s32 %s23, %s25
        %s313 = smul.u32 16, %s312
        %s314 = sadd.s32 %s23, %s25
        %p315 = scmp.lt.s32.totalorder %s314, 0
        %s316 = scalar_select %p315, %s314, 0
        %s317 = smul.addr %s316, 8
        %s318 = scalar_lea.vmem %s2, %s317
        %s319 = sadd.s32 %s23, %s25
        %p320 = scmp.lt.s32.totalorder %s24, 1
        %s321 = scalar_select %p320, %s24, 1
        %s322 = smul.addr %s321, 8
        %s323 = scalar_lea.vmem %s3, %s322
        %p324 = scmp.eq.s32.totalorder %s25, 0
        // Predicated region
        $region37: #{tpu_custom_call.1} parent=35 // pred_check
          %p325 = pneg %p324
        $region38: #{tpu_custom_call.1} parent=35 // pred_check_branch
          %327 = sbr.rel (%p325) target = $region40
        $region39: #{tpu_custom_call.1} parent=35 // pred_region
          %328 = vst [vmem:[#allocation2] sm:$0xff] 0.0
        $region40: #{tpu_custom_call.1} parent=35 // pred_fallthru
          _
        %s329 = sadd.s32 %s23, %s25
        %v330 = vlaneseq
        %v331 = vand.u32 %v330, 127
        %s332 = smul.u32 %s329, 128
        %v333 = vstv %s332
        %v334 = vadd.s32 %v331, %v333
        %vm335 = vcmp.lt.s32.totalorder %v334, 128
        %v336 = vld [vmem:[%s299] sm:$0xff]
        %v337 = vld [vmem:[%s299 + $0x8] sm:$0xff]
        %v338 = vld [vmem:[%s299 + $0x10] sm:$0xff]
        %v339 = vld [vmem:[%s299 + $0x18] sm:$0xff]
        %v340 = vld [vmem:[%s299 + $0x20] sm:$0xff]
        %v341 = vld [vmem:[%s299 + $0x28] sm:$0xff]
        %v342 = vld [vmem:[%s299 + $0x30] sm:$0xff]
        %v343 = vld [vmem:[%s299 + $0x38] sm:$0xff]
        %v344 = vld [vmem:[%s299 + $0x40] sm:$0xff]
        %v345 = vld [vmem:[%s299 + $0x48] sm:$0xff]
        %v346 = vld [vmem:[%s299 + $0x50] sm:$0xff]
        %v347 = vld [vmem:[%s299 + $0x58] sm:$0xff]
        %v348 = vld [vmem:[%s299 + $0x60] sm:$0xff]
        %v349 = vld [vmem:[%s299 + $0x68] sm:$0xff]
        %v350 = vld [vmem:[%s299 + $0x70] sm:$0xff]
        %v351 = vld [vmem:[%s299 + $0x78] sm:$0xff]
        %352 = vxpose.xlu0.b32.start [1/16] %v336, 128
        %353 = vxpose.xlu0.b32.cont [2/16] %v337, 128
        %354 = vxpose.xlu0.b32.cont [3/16] %v338, 128
        %355 = vxpose.xlu0.b32.cont [4/16] %v339, 128
        %356 = vxpose.xlu0.b32.cont [5/16] %v340, 128
        %357 = vxpose.xlu0.b32.cont [6/16] %v341, 128
        %358 = vxpose.xlu0.b32.cont [7/16] %v342, 128
        %359 = vxpose.xlu0.b32.cont [8/16] %v343, 128
        %360 = vxpose.xlu0.b32.cont [9/16] %v344, 128
        %361 = vxpose.xlu0.b32.cont [10/16] %v345, 128
        %362 = vxpose.xlu0.b32.cont [11/16] %v346, 128
        %363 = vxpose.xlu0.b32.cont [12/16] %v347, 128
        %364 = vxpose.xlu0.b32.cont [13/16] %v348, 128
        %365 = vxpose.xlu0.b32.cont [14/16] %v349, 128
        %366 = vxpose.xlu0.b32.cont [15/16] %v350, 128
        %367 = vxpose.xlu0.b32.end [16/16] %v351, 128
        %v368 = vpop.trf.xlu0
        %v369 = vpop.trf.xlu0
        %v370 = vpop.trf.xlu0
        %v371 = vpop.trf.xlu0
        %v372 = vpop.trf.xlu0
        %v373 = vpop.trf.xlu0
        %v374 = vpop.trf.xlu0
        %v375 = vpop.trf.xlu0
        %v376 = vpop.trf.xlu0
        %v377 = vpop.trf.xlu0
        %v378 = vpop.trf.xlu0
        %v379 = vpop.trf.xlu0
        %v380 = vpop.trf.xlu0
        %v381 = vpop.trf.xlu0
        %v382 = vpop.trf.xlu0
        %v383 = vpop.trf.xlu0
        %v384 = vmax.f32 %v368, 0.0001
        %v385 = vmin.f32 %v384, 0.9999
        %v386 = vld [vmem:[%s311] sm:$0xff]
        %v387 = vld [vmem:[%s311 + $0x8] sm:$0xff]
        %v388 = vld [vmem:[%s311 + $0x10] sm:$0xff]
        %v389 = vld [vmem:[%s311 + $0x18] sm:$0xff]
        %v390 = vld [vmem:[%s311 + $0x20] sm:$0xff]
        %v391 = vld [vmem:[%s311 + $0x28] sm:$0xff]
        %v392 = vld [vmem:[%s311 + $0x30] sm:$0xff]
        %v393 = vld [vmem:[%s311 + $0x38] sm:$0xff]
        %v394 = vld [vmem:[%s311 + $0x40] sm:$0xff]
        %v395 = vld [vmem:[%s311 + $0x48] sm:$0xff]
        %v396 = vld [vmem:[%s311 + $0x50] sm:$0xff]
        %v397 = vld [vmem:[%s311 + $0x58] sm:$0xff]
        %v398 = vld [vmem:[%s311 + $0x60] sm:$0xff]
        %v399 = vld [vmem:[%s311 + $0x68] sm:$0xff]
        %v400 = vld [vmem:[%s311 + $0x70] sm:$0xff]
        %v401 = vld [vmem:[%s311 + $0x78] sm:$0xff]
        %402 = vxpose.xlu0.b32.start [1/16] %v386, 128
        %403 = vxpose.xlu0.b32.cont [2/16] %v387, 128
        %404 = vxpose.xlu0.b32.cont [3/16] %v388, 128
        %405 = vxpose.xlu0.b32.cont [4/16] %v389, 128
        %406 = vxpose.xlu0.b32.cont [5/16] %v390, 128
        %407 = vxpose.xlu0.b32.cont [6/16] %v391, 128
        %408 = vxpose.xlu0.b32.cont [7/16] %v392, 128
        %409 = vxpose.xlu0.b32.cont [8/16] %v393, 128
        %410 = vxpose.xlu0.b32.cont [9/16] %v394, 128
        %411 = vxpose.xlu0.b32.cont [10/16] %v395, 128
        %412 = vxpose.xlu0.b32.cont [11/16] %v396, 128
        %413 = vxpose.xlu0.b32.cont [12/16] %v397, 128
        %414 = vxpose.xlu0.b32.cont [13/16] %v398, 128
        %415 = vxpose.xlu0.b32.cont [14/16] %v399, 128
        %416 = vxpose.xlu0.b32.cont [15/16] %v400, 128
        %417 = vxpose.xlu0.b32.end [16/16] %v401, 128
        %v418 = vpop.trf.xlu0
        %v419 = vpop.trf.xlu0
        %v420 = vpop.trf.xlu0
        %v421 = vpop.trf.xlu0
        %v422 = vpop.trf.xlu0
        %v423 = vpop.trf.xlu0
        %v424 = vpop.trf.xlu0
        %v425 = vpop.trf.xlu0
        %v426 = vpop.trf.xlu0
        %v427 = vpop.trf.xlu0
        %v428 = vpop.trf.xlu0
        %v429 = vpop.trf.xlu0
        %v430 = vpop.trf.xlu0
        %v431 = vpop.trf.xlu0
        %v432 = vpop.trf.xlu0
        %v433 = vpop.trf.xlu0
        %v434 = vld [vmem:[%s318] sm:$0xff]
        %v435 = vld [vmem:[%s323] sm:$0xff]
        %vm436 = vcmp.ne.f32.partialorder %v435, -1.0
        %438 = vrot.lane.b32.xlu0 %v435, 2
        %v439 = vpop.permute.xlu0 %438
        %v441 = vsub.f32 %v435, %v439
        %443 = vrot.lane.b32.xlu0 %v441, 127
        %v444 = vpop.permute.xlu0 %443
        %v446 = vmul.f32 %v441, %v444
        %v447 = vlaneseq
        %v448 = vshrl.u32 %v447, 7
        %v449 = vsub.s32 2, %v448
        %v450 = vrot.slane %v434, %v449
        %451 = vset.pattern.permute.xlu0 2
        %452 = vperm.xlu0 %451, %v435
        %v453 = vpop.permute.xlu0 %452
        %v455 = vmin.f32 %v450, %v453
        %v456 = vlaneseq
        %v457 = vshrl.u32 %v456, 7
        %v458 = vsub.s32 0, %v457
        %v459 = vrot.slane %v434, %v458
        %460 = vset.pattern.permute.xlu0 0
        %461 = vperm.xlu0 %460, %v435
        %v462 = vpop.permute.xlu0 %461
        %v464 = vmax.f32 %v459, %v462
        %v465 = vsub.f32 %v455, %v464
        %v466 = vmax.f32 %v465, 0.0
        %v467 = vlaneseq
        %v468 = vshrl.u32 %v467, 7
        %v469 = vsub.s32 3, %v468
        %v470 = vrot.slane %v434, %v469
        %471 = vset.pattern.permute.xlu0 3
        %472 = vperm.xlu0 %471, %v435
        %v473 = vpop.permute.xlu0 %472
        %v475 = vmin.f32 %v470, %v473
        %v476 = vlaneseq
        %v477 = vshrl.u32 %v476, 7
        %v478 = vsub.s32 1, %v477
        %v479 = vrot.slane %v434, %v478
        %480 = vset.pattern.permute.xlu0 1
        %481 = vperm.xlu0 %480, %v435
        %v482 = vpop.permute.xlu0 %481
        %v484 = vmax.f32 %v479, %v482
        %v485 = vsub.f32 %v475, %v484
        %v486 = vmax.f32 %v485, 0.0
        %v487 = vmul.f32 %v466, %v486
        %v489 = vrot.slane %v434, 1
        %v491 = vmul.f32 %v434, %v489
        %v492 = vlaneseq
        %v493 = vshrl.u32 %v492, 7
        %v494 = vsub.s32 4, %v493
        %v495 = vrot.slane %v491, %v494
        %497 = vset.pattern.permute.xlu0 2
        %498 = vperm.xlu0 %497, %v446
        %v499 = vpop.permute.xlu0 %498
        %v501 = vadd.f32 %v495, %v499
        %v502 = vsub.f32 %v501, %v487
        %v503 = vmax.f32 %v502, 1e-08
        %v504 = vrcp.pop %v503
        %v505 = vmul.f32 %v487, %v504
        %v506 = vsel %vm436, 1, 0
        %507 = vset.pattern.permute.xlu0 4
        %508 = vperm.xlu0 %507, %v506
        %v509 = vpop.permute.xlu0 %508
        %vm510 = vcmp.eq.s32.totalorder %v509, 1
        %v511 = vsel %vm510, %v505, -1.0
        %v512 = vrot.slane %v511, 4
        %v513 = vmax.f32 %v511, %v512
        %v514 = vrot.slane %v513, 2
        %v515 = vmax.f32 %v513, %v514
        %v516 = vrot.slane %v515, 1
        %v517 = vmax.f32 %v515, %v516
        %v518 = vlaneseq
        %v519 = vshrl.u32 %v518, 7
        %vm520 = vcmp.eq.f32.partialorder %v505, %v517
        %vm521 = vmand %vm520, %vm510
        %v522 = vsel %vm521, %v519, 9
        %v523 = vrot.slane %v522, 4
        %vm524 = vcmp.lt.s32.totalorder %v522, %v523
        %v525 = vsel %vm524, %v522, %v523
        %v526 = vrot.slane %v525, 2
        %vm527 = vcmp.lt.s32.totalorder %v525, %v526
        %v528 = vsel %vm527, %v525, %v526
        %v529 = vrot.slane %v528, 1
        %vm530 = vcmp.lt.s32.totalorder %v528, %v529
        %v531 = vsel %vm530, %v528, %v529
        %vm532 = vcmp.eq.s32.totalorder %v519, %v531
        %v533 = vsel %vm532, 1, 0
        %v534 = vcvt.s32.f32 %v533
        %v535 = vmul.f32 %v534, %v462
        %v536 = vrot.slane %v535, 4
        %v537 = vadd.f32 %v535, %v536
        %v538 = vrot.slane %v537, 2
        %v539 = vadd.f32 %v537, %v538
        %v540 = vrot.slane %v539, 1
        %v541 = vadd.f32 %v539, %v540
        %v542 = vmul.f32 %v534, %v482
        %v543 = vrot.slane %v542, 4
        %v544 = vadd.f32 %v542, %v543
        %v545 = vrot.slane %v544, 2
        %v546 = vadd.f32 %v544, %v545
        %v547 = vrot.slane %v546, 1
        %v548 = vadd.f32 %v546, %v547
        %v549 = vmul.f32 %v534, %v453
        %v550 = vrot.slane %v549, 4
        %v551 = vadd.f32 %v549, %v550
        %v552 = vrot.slane %v551, 2
        %v553 = vadd.f32 %v551, %v552
        %v554 = vrot.slane %v553, 1
        %v555 = vadd.f32 %v553, %v554
        %v556 = vmul.f32 %v534, %v473
        %v557 = vrot.slane %v556, 4
        %v558 = vadd.f32 %v556, %v557
        %v559 = vrot.slane %v558, 2
        %v560 = vadd.f32 %v558, %v559
        %v561 = vrot.slane %v560, 1
        %v562 = vadd.f32 %v560, %v561
        %563 = vset.pattern.permute.xlu0 4
        %564 = vperm.xlu0 %563, %v435
        %v565 = vpop.permute.xlu0 %564
        %v567 = vmul.f32 %v534, %v565
        %v568 = vrot.slane %v567, 4
        %v569 = vadd.f32 %v567, %v568
        %v570 = vrot.slane %v569, 2
        %v571 = vadd.f32 %v569, %v570
        %v572 = vrot.slane %v571, 1
        %v573 = vadd.f32 %v571, %v572
        %vm574 = vcmp.ge.f32.partialorder %v517, 0.6
        %vm575 = vmand %vm574, %vm335
        %vm576 = vcmp.lt.f32.partialorder %v517, 0.5
        %vm577 = vmor %vm576, %vm575
        %vm578 = vmand %vm577, %vm335
        %v579 = vsub.f32 1.0, %v385
        %v580 = vlog2.pop %v579
        %v581 = vmul.f32 %v580, 0.6931472
        %v582 = vsub.f32 0.0, %v581
        %v583 = vmul.f32 %v385, %v385
        %v584 = vmul.f32 %v583, %v582
        %vm585 = vcmask 1043456
        %v586 = vsel %vm585, %v584, 0.0
        %v587 = vrot.slane %v586, 4
        %v588 = vadd.f32 %v586, %v587
        %v589 = vrot.slane %v588, 2
        %v590 = vadd.f32 %v588, %v589
        %v591 = vrot.slane %v590, 1
        %v592 = vadd.f32 %v590, %v591
        %v593 = vmul.f32 %v592, 0.75
        %v594 = vcvt.f32.s32.to.zero.pseudo %v573
        %vm595 = vcmp.eq.s32.totalorder %v519, %v594
        %v596 = vsel %vm595, 1, 0
        %v597 = vcvt.s32.f32 %v596
        %v598 = vmul.f32 %v597, %v385
        %v599 = vsel %vm585, %v598, 0.0
        %v600 = vrot.slane %v599, 4
        %v601 = vadd.f32 %v599, %v600
        %v602 = vrot.slane %v601, 2
        %v603 = vadd.f32 %v601, %v602
        %v604 = vrot.slane %v603, 1
        %v605 = vadd.f32 %v603, %v604
        %v606 = vmul.f32 %v597, %v584
        %v607 = vsel %vm585, %v606, 0.0
        %v608 = vrot.slane %v607, 4
        %v609 = vadd.f32 %v607, %v608
        %v610 = vrot.slane %v609, 2
        %v611 = vadd.f32 %v609, %v610
        %v612 = vrot.slane %v611, 1
        %v613 = vadd.f32 %v611, %v612
        %v614 = vmul.f32 %v613, 0.75
        %v615 = vsub.f32 1.0, %v605
        %v616 = vmul.f32 %v615, 0.25
        %v617 = vmul.f32 %v616, %v615
        %v618 = vlog2.pop %v605
        %v619 = vmul.f32 %v618, 0.6931472
        %v620 = vsub.f32 0.0, %v619
        %v621 = vmul.f32 %v617, %v620
        %v622 = vsel %vm578, %v593, 0.0
        %v623 = vsub.f32 %v621, %v614
        %v624 = vsel %vm575, %v623, 0.0
        %v625 = vadd.f32 %v622, %v624
        %v626 = vsub.f32 %v555, %v541
        %v627 = vsub.f32 %v562, %v548
        %v628 = vmul.f32 %v626, 0.5
        %v629 = vadd.f32 %v541, %v628
        %v630 = vmul.f32 %v627, 0.5
        %v631 = vadd.f32 %v548, %v630
        %v632 = vmax.f32 %v626, 1.0
        %v633 = vmax.f32 %v627, 1.0
        %v634 = vsub.f32 %v629, %v434
        %v635 = vrot.slane %v434, 6
        %v637 = vrcp.pop %v635
        %v638 = vmul.f32 %v634, %v637
        %v639 = vsub.f32 %v631, %v434
        %v640 = vmul.f32 %v639, %v637
        %v641 = vrcp.pop %v434
        %v642 = vmul.f32 %v632, %v641
        %v643 = vlog2.pop %v642
        %v644 = vmul.f32 %v643, 0.6931472
        %v645 = vmul.f32 %v633, %v641
        %v646 = vlog2.pop %v645
        %v647 = vmul.f32 %v646, 0.6931472
        %v649 = vrot.slane %v418, 2
        %v651 = vsub.f32 %v638, %v649
        %v652 = vand.u32 2147483647, %v651
        %v653 = vsub.f32 %v640, %v649
        %v654 = vand.u32 2147483647, %v653
        %v655 = vrot.slane %v418, 6
        %v657 = vsub.f32 %v644, %v655
        %v658 = vand.u32 2147483647, %v657
        %v659 = vsub.f32 %v647, %v655
        %v660 = vand.u32 2147483647, %v659
        %vm661 = vcmp.le.f32.partialorder %v652, 1.0
        %v662 = vmul.f32 %v652, 0.5
        %v663 = vmul.f32 %v662, %v652
        %v664 = vsub.f32 %v652, 0.5
        %v665 = vsel %vm661, %v663, %v664
        %vm666 = vcmp.le.f32.partialorder %v654, 1.0
        %v667 = vmul.f32 %v654, 0.5
        %v668 = vmul.f32 %v667, %v654
        %v669 = vsub.f32 %v654, 0.5
        %v670 = vsel %vm666, %v668, %v669
        %v672 = vrot.slane %v670, 1
        %v674 = vadd.f32 %v665, %v672
        %vm675 = vcmp.le.f32.partialorder %v658, 1.0
        %v676 = vmul.f32 %v658, 0.5
        %v677 = vmul.f32 %v676, %v658
        %v678 = vsub.f32 %v658, 0.5
        %v679 = vsel %vm675, %v677, %v678
        %v681 = vrot.slane %v679, 6
        %v683 = vadd.f32 %v674, %v681
        %vm684 = vcmp.le.f32.partialorder %v660, 1.0
        %v685 = vmul.f32 %v660, 0.5
        %v686 = vmul.f32 %v685, %v660
        %v687 = vsub.f32 %v660, 0.5
        %v688 = vsel %vm684, %v686, %v687
        %v690 = vrot.slane %v688, 7
        %v692 = vadd.f32 %v683, %v690
        %v693 = vsel %vm575, %v692, 0.0
        %v694 = vld [vmem:[#allocation2] sm:$0x1]
        %v695 = vadd.f32 %v694, %v625
        %696 = vst [vmem:[#allocation2] sm:$0x1] %v695
        %v697 = vld [vmem:[#allocation2 + $0x1] sm:$0x1]
        %v699 = vrot.slane %v693, 6
        %v701 = vadd.f32 %v697, %v699
        %702 = vst [vmem:[#allocation2 + $0x1] sm:$0x1] %v701
        %v703 = vld [vmem:[#allocation2 + $0x2] sm:$0x1]
        %v704 = vsel %vm575, 1, 0
        %v705 = vcvt.s32.f32 %v704
        %v706 = vadd.f32 %v703, %v705
        %707 = vst [vmem:[#allocation2 + $0x2] sm:$0x1] %v706
        // Predicated region
        $region41: #{tpu_custom_call.1} parent=35 // pred_check
          %p708 = pneg %p324
        $region42: #{tpu_custom_call.1} parent=35 // pred_check_branch
          %710 = sbr.rel (%p708) target = $region44
        $region43: #{tpu_custom_call.1} parent=35 // pred_region
          %v711 = vld [vmem:[#allocation2] sm:$0xff]
          %712 = vadd.xlane.f32.xlu0 %v711
          %v713 = vpop.xlane.xlu0 %712
          %714 = vst [vmem:[%s289] sm:$0xff] %v713
        $region44: #{tpu_custom_call.1} parent=35 // pred_fallthru
          _
        %s715 = sand.u32 %s161, 1
        %s716 = scalar_lea.sflag [#allocation4], %s715
        %s717 = sand.u32 %s161, 1
        %s718 = smul.addr %s717, 8
        %s719 = scalar_lea.vmem [#allocation3], %s718
        // Predicated region
        $region45: #{tpu_custom_call.1} parent=35 // pred_check
          %p720 = pneg %p171
        $region46: #{tpu_custom_call.1} parent=35 // pred_check_branch
          %722 = sbr.rel (%p720) target = $region48
        $region47: #{tpu_custom_call.1} parent=35 // pred_region
          %s724 = ssub.s32 128, 128
          %725 = vsyncadd %s716, %s724
          %s726 = smul.addr %s23, 2
          %s727 = sadd.s32 %s24, %s726
          %s728 = smul.addr %s727, 128
          %s729 = scalar_lea.hbm %s4, %s728
          %s731 = sshll.u32 %s719, 4
          %s732 = int_to_ptr.vmem [resolvable:$true] %s731
          %734 = dma.vmem_to_hbm [thread:$0]  %s732, 128, %s729, %s716
        $region48: #{tpu_custom_call.1} parent=35 // pred_fallthru
          _
      $region36: #{tpu_custom_call.1} parent=5 // pred_fallthru
        _
      %p735 = scmp.le.s32.totalorder 2, %s13
      // Predicated region
      $region49: #{tpu_custom_call.1} parent=5 // pred_check
        %p736 = pneg %p735
      $region50: #{tpu_custom_call.1} parent=5 // pred_check_branch
        %738 = sbr.rel (%p736) target = $region52
      $region51: #{tpu_custom_call.1} parent=5 // pred_region
        %s739 = ssub.s32 %s13, 2
        // Predicated region
        $region53: #{tpu_custom_call.1} parent=51 // pred_check
          %p740 = pneg %p177
        $region54: #{tpu_custom_call.1} parent=51 // pred_check_branch
          %742 = sbr.rel (%p740) target = $region56
        $region55: #{tpu_custom_call.1} parent=51 // pred_region
          %s743 = sand.u32 %s162, 1
          %s744 = scalar_lea.sflag [#allocation4], %s743
          %s745 = sand.u32 %s162, 1
          %s746 = smul.addr %s745, 8
          %s747 = scalar_lea.vmem [#allocation3], %s746
          %748 = dma.done %s744, 128
        $region56: #{tpu_custom_call.1} parent=51 // pred_fallthru
          _
      $region52: #{tpu_custom_call.1} parent=5 // pred_fallthru
        _
    $region6: #{tpu_custom_call.1} parent=1 // loop_footer
      %s17 = sadd.s32 1, %s13
    $region7: #{tpu_custom_call.1} parent=1 // loop_footer_branch
      %12 = sbr.rel target = $region3
    $region8: #{tpu_custom_call.1} parent=1 // loop_exit
      _
    %749 = vsyncpa [#allocation4], 1
    %s750 = scalar_lea.sflag [#allocation4], 1
    %751 = vsyncpa %s750, 1

</llo_original>
